<compile_context>
chip_gen: v5e
topology: v5e:2x2
jax: 0.10.0
libtpu: 0.0.40
codegen_flags: <defaults>
</compile_context>

<pallas_src>
import functools

import jax
import jax.numpy as jnp
from jax.experimental import pallas as pl
from jax.experimental.pallas import tpu as pltpu


def _round_up(x, m):
    return ((x + m - 1) // m) * m


def _tangos_kernel(n_layers, x_ref, *refs):
    # refs layout: (w_0, b_0, ..., w_{n-1}, b_{n-1}, w_head_T, b_head, out_ref)
    out_ref = refs[-1]
    params = refs[:-1]

    h = x_ref[...]                                     # (tile, d_in), bf16
    # hidden layers: Linear -> ReLU  (dropout is identity in eval mode)
    for i in range(n_layers):
        w = params[2 * i][...]                         # (d_prev, d_i), bf16
        b = params[2 * i + 1][...]                     # (1, d_i), f32
        a = jnp.dot(h, w, preferred_element_type=jnp.float32) + b
        h = jnp.maximum(a, 0.0).astype(h.dtype)        # back to bf16 for next MXU pass

    wh = params[2 * n_layers][...]                     # (d_out, d_last), bf16
    bh = params[2 * n_layers + 1][...]                 # (d_out, 1), f32
    # Lane-dense head: contract the feature axis of both operands (QK^T-style
    # dot_general) so logits land as (d_out, tile) with batch on the lane axis.
    logit = jax.lax.dot_general(
        wh, h, (((1,), (1,)), ((), ())),
        preferred_element_type=jnp.float32) + bh
    out_ref[...] = logit.astype(out_ref.dtype)


def tangos_forward(x, layer_weights, layer_biases, head_w, head_b, *, d_out,
                   batch_tile=512):
    """Fused Tangos MLP forward.

    x:             [B, d_in]
    layer_weights: list of [in, out]   (pre-transposed nn.Linear weights)
    layer_biases:  list of [out]
    head_w:        [in, d_out]
    head_b:        [d_out]
    """
    B, d_in = x.shape
    n_layers = len(layer_weights)
    out_dtype = x.dtype

    # --- batch tiling --------------------------------------------------------
    # Big tiles amortize the ~0.35us/grid-step overhead; keep >= 2 grid steps
    # when B allows so dimension_semantics=("parallel",) can shard across the
    # two TensorCores on v7x. Tile is a multiple of 128 so the lane-dense
    # output block satisfies the (8, 128) divisibility rule.
    batch_tile = _round_up(int(batch_tile), 128)
    tile = min(batch_tile, _round_up(pl.cdiv(B, 2), 128))
    B_pad = _round_up(B, tile)
    if B_pad != B:
        x = jnp.pad(x, ((0, B_pad - B), (0, 0)))
    grid = B_pad // tile

    # --- dtype policy: bf16 data, f32 accumulation ---------------------------
    x_bf = x.astype(jnp.bfloat16)

    inputs = [x_bf]
    in_specs = [pl.BlockSpec((tile, d_in), lambda i: (i, 0))]
    dims = [d_in]
    for w, b in zip(layer_weights, layer_biases):
        w_bf = w.astype(jnp.bfloat16)
        b2 = b.reshape(1, -1).astype(jnp.float32)
        inputs += [w_bf, b2]
        # NOTE: these lambdas deliberately close over nothing loop-dependent.
        in_specs += [
            pl.BlockSpec(w_bf.shape, lambda i: (0, 0)),
            pl.BlockSpec(b2.shape, lambda i: (0, 0)),
        ]
        dims.append(int(w.shape[1]))
    wh_t = head_w.T.astype(jnp.bfloat16)               # (d_out, d_last)
    bh2 = head_b.reshape(d_out, 1).astype(jnp.float32)
    inputs += [wh_t, bh2]
    in_specs += [
        pl.BlockSpec(wh_t.shape, lambda i: (0, 0)),
        pl.BlockSpec(bh2.shape, lambda i: (0, 0)),
    ]
    dims.append(int(d_out))

    flops = 2 * B_pad * sum(a * b for a, b in zip(dims[:-1], dims[1:]))
    bytes_accessed = (
        int(x_bf.size) * 2
        + sum(int(t.size) * t.dtype.itemsize for t in inputs[1:])
        + B_pad * d_out * jnp.dtype(out_dtype).itemsize)

    out = pl.pallas_call(
        functools.partial(_tangos_kernel, n_layers),
        out_shape=jax.ShapeDtypeStruct((d_out, B_pad), out_dtype),
        grid_spec=pltpu.PrefetchScalarGridSpec(
            num_scalar_prefetch=0,
            grid=(grid,),
            in_specs=in_specs,
            out_specs=pl.BlockSpec((d_out, tile), lambda i: (0, i)),
        ),
        compiler_params=pltpu.CompilerParams(
            dimension_semantics=("parallel",)),
        cost_estimate=pl.CostEstimate(
            flops=int(flops), transcendentals=0,
            bytes_accessed=int(bytes_accessed)),
    )(*inputs)

    out = out[:, :B]
    if d_out == 1:
        return out[0]          # matches `logit.squeeze(-1)` in the PyTorch module
    return out.T               # back to (B, d_out)


def _init_linear(key, fan_in, fan_out, dtype=jnp.float32):
    # nn.Linear default init: U(-1/sqrt(fan_in), 1/sqrt(fan_in)).
    kw, kb = jax.random.split(key)
    bound = 1.0 / jnp.sqrt(jnp.array(fan_in, dtype))
    w = jax.random.uniform(kw, (fan_in, fan_out), dtype, -bound, bound)  # [in, out]
    b = jax.random.uniform(kb, (fan_out,), dtype, -bound, bound)
    return w, b


def _reference_forward(x, layer_weights, layer_biases, head_w, head_b, d_out,
                       *, mirror_bf16):
    """Pure-JAX reference. With mirror_bf16=True it applies the same bf16
    quantization policy as the kernel (bf16 data, f32 accumulation)."""
    def q(a):
        return (a.astype(jnp.bfloat16).astype(jnp.float32)
                if mirror_bf16 else a.astype(jnp.float32))
    h = q(x)
    for w, b in zip(layer_weights, layer_biases):
        h = jnp.maximum(h @ q(w) + b, 0.0)
        if mirror_bf16:
            h = h.astype(jnp.bfloat16).astype(jnp.float32)
    logit = h @ q(head_w) + head_b
    if d_out == 1:
        logit = logit.squeeze(-1)
    return logit


if __name__ == "__main__":
    # Small tabular-MLP shapes consistent with the module.
    d_in = 16
    d_layers = [32, 32]
    d_out = 1
    batch = 1000          # non-multiple of the tile: exercises padding path; 2 grid steps

    key = jax.random.PRNGKey(0)
    keys = jax.random.split(key, len(d_layers) + 2)

    layer_weights, layer_biases = [], []
    prev = d_in
    for i, d in enumerate(d_layers):
        w, b = _init_linear(keys[i], prev, d)
        layer_weights.append(w)
        layer_biases.append(b)
        prev = d
    head_w, head_b = _init_linear(keys[len(d_layers)], prev, d_out)

    x = jax.random.normal(keys[-1], (batch, d_in), jnp.float32)
    x_cat = None  # unused by forward(), as in the PyTorch module

    out = tangos_forward(x, layer_weights, layer_biases, head_w, head_b,
                         d_out=d_out, batch_tile=512)
    out = jax.block_until_ready(out)

    # Bit-policy-matched reference (tight tolerance).
    ref_bf = _reference_forward(x, layer_weights, layer_biases, head_w, head_b,
                                d_out, mirror_bf16=True)
    # Full-f32 reference (loose tolerance; sanity check on the bf16 policy).
    ref_f32 = _reference_forward(x, layer_weights, layer_biases, head_w, head_b,
                                 d_out, mirror_bf16=False)

    assert out.shape == ref_bf.shape
    assert jnp.allclose(out, ref_bf, atol=1e-4, rtol=1e-4)
    assert jnp.allclose(out, ref_f32, atol=5e-2, rtol=5e-2)

    # TODO(synk): cal_tangos_loss / cal_representation (jacobian + cosine
    # regularizer) are training-only auxiliary losses, not part of forward().
    print("KERNEL_OK")
</pallas_src>

<mosaic_0001>
module attributes {stable_mosaic.version = 11 : i64} {
  func.func @_tangos_kernel(%arg0: i32, %arg1: memref<512x16xbf16, #tpu.memory_space<vmem>>, %arg2: memref<16x32xbf16, #tpu.memory_space<vmem>>, %arg3: memref<1x32xf32, #tpu.memory_space<vmem>>, %arg4: memref<32x32xbf16, #tpu.memory_space<vmem>>, %arg5: memref<1x32xf32, #tpu.memory_space<vmem>>, %arg6: memref<1x32xbf16, #tpu.memory_space<vmem>>, %arg7: memref<1x1xf32, #tpu.memory_space<vmem>>, %arg8: memref<1x512xf32, #tpu.memory_space<vmem>>) attributes {dimension_semantics = [#tpu.dimension_semantics<parallel>], iteration_bounds = array<i64: 2>, scalar_prefetch = 0 : i64, scratch_operands = 0 : i64, tpu.core_type = #tpu.core_type<tc>, window_params = [{transform_indices = @transform_0, window_bounds = array<i64: 512, 16>}, {pipeline_mode = #tpu.pipeline_mode<synchronous>, transform_indices = @transform_1, window_bounds = array<i64: 16, 32>}, {pipeline_mode = #tpu.pipeline_mode<synchronous>, transform_indices = @transform_2, window_bounds = array<i64: 1, 32>}, {pipeline_mode = #tpu.pipeline_mode<synchronous>, transform_indices = @transform_3, window_bounds = array<i64: 32, 32>}, {pipeline_mode = #tpu.pipeline_mode<synchronous>, transform_indices = @transform_4, window_bounds = array<i64: 1, 32>}, {pipeline_mode = #tpu.pipeline_mode<synchronous>, transform_indices = @transform_5, window_bounds = array<i64: 1, 32>}, {pipeline_mode = #tpu.pipeline_mode<synchronous>, transform_indices = @transform_6, window_bounds = array<i64: 1, 1>}, {transform_indices = @transform_7, window_bounds = array<i64: 1, 512>}]} {
    %c0 = arith.constant 0 : index
    %c0_0 = arith.constant 0 : index
    %0 = vector.load %arg1[%c0, %c0_0] : memref<512x16xbf16, #tpu.memory_space<vmem>>, vector<512x16xbf16>
    %c0_1 = arith.constant 0 : index
    %c0_2 = arith.constant 0 : index
    %1 = vector.load %arg2[%c0_1, %c0_2] : memref<16x32xbf16, #tpu.memory_space<vmem>>, vector<16x32xbf16>
    %c0_3 = arith.constant 0 : index
    %c0_4 = arith.constant 0 : index
    %2 = vector.load %arg3[%c0_3, %c0_4] : memref<1x32xf32, #tpu.memory_space<vmem>>, vector<1x32xf32>
    %cst = arith.constant dense<0.000000e+00> : vector<512x32xf32>
    %3 = tpu.matmul %0, %1, %cst {dimension_numbers = #tpu.dot_dimension_numbers<[1], [0], [0], [1], [0, 0, 1, 1], [], []>} : vector<512x16xbf16>, vector<16x32xbf16>, vector<512x32xf32> -> vector<512x32xf32>
    %4 = vector.broadcast %2 : vector<1x32xf32> to vector<512x32xf32>
    %5 = arith.addf %3, %4 : vector<512x32xf32>
    %cst_5 = arith.constant 0.000000e+00 : f32
    %6 = vector.broadcast %cst_5 : f32 to vector<512x32xf32>
    %7 = arith.maximumf %5, %6 : vector<512x32xf32>
    %8 = arith.truncf %7 : vector<512x32xf32> to vector<512x32xbf16>
    %c0_6 = arith.constant 0 : index
    %c0_7 = arith.constant 0 : index
    %9 = vector.load %arg4[%c0_6, %c0_7] : memref<32x32xbf16, #tpu.memory_space<vmem>>, vector<32x32xbf16>
    %c0_8 = arith.constant 0 : index
    %c0_9 = arith.constant 0 : index
    %10 = vector.load %arg5[%c0_8, %c0_9] : memref<1x32xf32, #tpu.memory_space<vmem>>, vector<1x32xf32>
    %cst_10 = arith.constant dense<0.000000e+00> : vector<512x32xf32>
    %11 = tpu.matmul %8, %9, %cst_10 {dimension_numbers = #tpu.dot_dimension_numbers<[1], [0], [0], [1], [0, 0, 1, 1], [], []>} : vector<512x32xbf16>, vector<32x32xbf16>, vector<512x32xf32> -> vector<512x32xf32>
    %12 = vector.broadcast %10 : vector<1x32xf32> to vector<512x32xf32>
    %13 = arith.addf %11, %12 : vector<512x32xf32>
    %cst_11 = arith.constant 0.000000e+00 : f32
    %14 = vector.broadcast %cst_11 : f32 to vector<512x32xf32>
    %15 = arith.maximumf %13, %14 : vector<512x32xf32>
    %16 = arith.truncf %15 : vector<512x32xf32> to vector<512x32xbf16>
    %c0_12 = arith.constant 0 : index
    %c0_13 = arith.constant 0 : index
    %17 = vector.load %arg6[%c0_12, %c0_13] : memref<1x32xbf16, #tpu.memory_space<vmem>>, vector<1x32xbf16>
    %c0_14 = arith.constant 0 : index
    %c0_15 = arith.constant 0 : index
    %18 = vector.load %arg7[%c0_14, %c0_15] : memref<1x1xf32, #tpu.memory_space<vmem>>, vector<1x1xf32>
    %cst_16 = arith.constant dense<0.000000e+00> : vector<1x512xf32>
    %19 = tpu.matmul %17, %16, %cst_16 {dimension_numbers = #tpu.dot_dimension_numbers<[1], [1], [0], [0], [0, 0, 1, 0], [], []>} : vector<1x32xbf16>, vector<512x32xbf16>, vector<1x512xf32> -> vector<1x512xf32>
    %20 = vector.broadcast %18 : vector<1x1xf32> to vector<1x512xf32>
    %21 = arith.addf %19, %20 : vector<1x512xf32>
    %c0_17 = arith.constant 0 : index
    %c0_18 = arith.constant 0 : index
    %22 = vector.load %arg8[%c0_17, %c0_18] : memref<1x512xf32, #tpu.memory_space<vmem>>, vector<1x512xf32>
    tpu.vector_store %arg8[%c0_17, %c0_18], %21 {strides = array<i32>} : memref<1x512xf32, #tpu.memory_space<vmem>>, vector<1x512xf32>,
    return
  }
  func.func @transform_0(%arg0: i32) -> (i32, i32) {
    %c0_i32 = arith.constant 0 : i32
    %c0_i32_0 = arith.constant 0 : i32
    return %arg0, %c0_i32 : i32, i32
  }
  func.func @transform_1(%arg0: i32) -> (i32, i32) {
    %c0_i32 = arith.constant 0 : i32
    %c0_i32_0 = arith.constant 0 : i32
    %c0_i32_1 = arith.constant 0 : i32
    return %c0_i32, %c0_i32_0 : i32, i32
  }
  func.func @transform_2(%arg0: i32) -> (i32, i32) {
    %c0_i32 = arith.constant 0 : i32
    %c0_i32_0 = arith.constant 0 : i32
    %c0_i32_1 = arith.constant 0 : i32
    return %c0_i32, %c0_i32_0 : i32, i32
  }
  func.func @transform_3(%arg0: i32) -> (i32, i32) {
    %c0_i32 = arith.constant 0 : i32
    %c0_i32_0 = arith.constant 0 : i32
    %c0_i32_1 = arith.constant 0 : i32
    return %c0_i32, %c0_i32_0 : i32, i32
  }
  func.func @transform_4(%arg0: i32) -> (i32, i32) {
    %c0_i32 = arith.constant 0 : i32
    %c0_i32_0 = arith.constant 0 : i32
    %c0_i32_1 = arith.constant 0 : i32
    return %c0_i32, %c0_i32_0 : i32, i32
  }
  func.func @transform_5(%arg0: i32) -> (i32, i32) {
    %c0_i32 = arith.constant 0 : i32
    %c0_i32_0 = arith.constant 0 : i32
    %c0_i32_1 = arith.constant 0 : i32
    return %c0_i32, %c0_i32_0 : i32, i32
  }
  func.func @transform_6(%arg0: i32) -> (i32, i32) {
    %c0_i32 = arith.constant 0 : i32
    %c0_i32_0 = arith.constant 0 : i32
    %c0_i32_1 = arith.constant 0 : i32
    return %c0_i32, %c0_i32_0 : i32, i32
  }
  func.func @transform_7(%arg0: i32) -> (i32, i32) {
    %c0_i32 = arith.constant 0 : i32
    %c0_i32_0 = arith.constant 0 : i32
    return %c0_i32, %arg0 : i32, i32
  }
}

</mosaic_0001>

<llo_original>
// kernel: tpu_custom_call.1
$region0: #{tpu_custom_call.1}
  #allocation0 [shape = 'u32[]', space=smem, size = 0x4, offset = 0x4, fixed_abs, tag = 'smem constant byte address 0x4 - core index']
  #allocation1 [shape = 'u32[72,128]{1,0:T(1,128)}', space=vmem, size = 0x9000, scoped, tag = 'internal scratch']
  #allocation2 [shape = 'f32[1,1]{1,0:T(1,128)S(1)}', space=vmem, size = 0x200, scoped, tag = 'scoped memory for tpu_custom_call.1']
  %s0 = inlined_call_operand.vmem [shape: bf16[1024,16], index: 0, kind: input, shape index: {}]
  %s1 = inlined_call_operand.vmem [shape: bf16[16,32], index: 1, kind: input, shape index: {}]
  %s2 = inlined_call_operand.vmem [shape: f32[1,32], index: 2, kind: input, shape index: {}]
  %s3 = inlined_call_operand.vmem [shape: bf16[32,32], index: 3, kind: input, shape index: {}]
  %s4 = inlined_call_operand.vmem [shape: f32[1,32], index: 4, kind: input, shape index: {}]
  %s5 = inlined_call_operand.vmem [shape: bf16[1,32], index: 5, kind: input, shape index: {}]
  %s6 = inlined_call_operand.<no memory space> [shape: f32[1,1], index: 6, kind: input, shape index: {}]
  %s7 = inlined_call_operand.hbm [shape: f32[1,1024], index: 7, kind: output, shape index: {}]
  %s8 = sld [smem:[#allocation0]]
  $region61: #{tpu_custom_call.1} parent=0
    _
  %s10 = ssub.s32 1, %s8
  %s11 = scalar_select 0, %s10, %s8
  %v12 = vstv %s6
  %13 = vst [vmem:[#allocation2] sm:$0x1] %v12
  $region1: #{tpu_custom_call.1} parent=0
    #allocation3 [shape = 'u8[4096]{0}', space=vmem, size = 0x1000, scoped, tag = 'output window, operand 0']
    #allocation4 [shape = 's32[2]{0}', space=sflag, size = 0x8, scoped, tag = 'scoped memory for tpu_custom_call.1']
    %14 = vsyncpa [#allocation4], 0
    %s15 = scalar_lea.sflag [#allocation4], 1
    %16 = vsyncpa %s15, 0
    loop: start=0, step=1, limit=4
    $region2: #{tpu_custom_call.1} parent=1 // loop_pre_header
      _
    $region3: #{tpu_custom_call.1} parent=1 // loop_header
      %s18 = sphi 0, %s22
      %p19 = scmp.ge.s32.totalorder %s18, 4
      %s28 = sphi 0, %s30
      %s31 = sphi 0, %s28
      %s32 = sphi 0, %s31
      %s48 = sphi 0, %s32
      %s52 = sphi 0, %s52
      %s54 = sphi 0, %s52
      %s55 = sphi 0, %s54
      %s69 = sphi 0, %s55
      %s73 = sphi 0, %s73
      %s75 = sphi 0, %s73
      %s76 = sphi 0, %s75
      %s90 = sphi 0, %s76
      %s94 = sphi 0, %s94
      %s96 = sphi 0, %s94
      %s97 = sphi 0, %s96
      %s111 = sphi 0, %s97
      %s115 = sphi 0, %s115
      %s117 = sphi 0, %s115
      %s118 = sphi 0, %s117
      %s132 = sphi 0, %s118
      %s136 = sphi 0, %s136
      %s138 = sphi 0, %s136
      %s139 = sphi 0, %s138
      %s153 = sphi 0, %s139
      %s157 = sphi 0, %s157
      %s159 = sphi 0, %s157
      %s160 = sphi 0, %s159
      %s174 = sphi 0, %s160
      %s180 = sphi 0, %s182
      %s183 = sphi 0, %s180
      %s184 = sphi 0, %s183
      %s200 = sphi 0, %s184
    $region4: #{tpu_custom_call.1} parent=1 // loop_header_branch
      %21 = sbr.rel (%p19) target = $region8
    $region5: #{tpu_custom_call.1} parent=1 // loop_body
      %s23 = ssub.s32 %s18, 1
      %s24 = ssub.s32 %s18, 2
      %s25 = sadd.s32 %s18, 1
      %s26 = ssub.s32 %s18, %s25
      %p27 = scmp.eq.s32.totalorder %s26, 0
      %s29 = sadd.s32 %s28, 1
      %s30 = scalar_select %p27, %s28, %s29
      %p33 = pneg %p27
      %p34 = scmp.eq.s32.totalorder %s18, 1
      %p35 = por %p33, %p34
      %p36 = scmp.ne.s32.totalorder %s28, %s31
      %p37 = scmp.eq.s32.totalorder %s18, 0
      %p38 = por %p36, %p37
      %p39 = scmp.ne.s32.totalorder %s28, %s31
      %p40 = scmp.eq.s32.totalorder %s23, 1
      %p41 = por %p39, %p40
      %p42 = scmp.ne.s32.totalorder %s31, %s32
      %p43 = scmp.eq.s32.totalorder %s23, 0
      %p44 = por %p42, %p43
      %p45 = scmp.ne.s32.totalorder %s31, %s32
      %p46 = scmp.eq.s32.totalorder %s24, 1
      %p47 = por %p45, %p46
      %p49 = scmp.ne.s32.totalorder %s32, %s48
      %p50 = scmp.eq.s32.totalorder %s24, 0
      %p51 = por %p49, %p50
      %s53 = sadd.s32 %s52, 1
      %p56 = scmp.eq.s32.totalorder %s18, 1
      %p57 = scmp.ne.s32.totalorder %s52, %s54
      %p58 = scmp.eq.s32.totalorder %s18, 0
      %p59 = por %p57, %p58
      %p60 = scmp.ne.s32.totalorder %s52, %s54
      %p61 = scmp.eq.s32.totalorder %s23, 1
      %p62 = por %p60, %p61
      %p63 = scmp.ne.s32.totalorder %s54, %s55
      %p64 = scmp.eq.s32.totalorder %s23, 0
      %p65 = por %p63, %p64
      %p66 = scmp.ne.s32.totalorder %s54, %s55
      %p67 = scmp.eq.s32.totalorder %s24, 1
      %p68 = por %p66, %p67
      %p70 = scmp.ne.s32.totalorder %s55, %s69
      %p71 = scmp.eq.s32.totalorder %s24, 0
      %p72 = por %p70, %p71
      %s74 = sadd.s32 %s73, 1
      %p77 = scmp.eq.s32.totalorder %s18, 1
      %p78 = scmp.ne.s32.totalorder %s73, %s75
      %p79 = scmp.eq.s32.totalorder %s18, 0
      %p80 = por %p78, %p79
      %p81 = scmp.ne.s32.totalorder %s73, %s75
      %p82 = scmp.eq.s32.totalorder %s23, 1
      %p83 = por %p81, %p82
      %p84 = scmp.ne.s32.totalorder %s75, %s76
      %p85 = scmp.eq.s32.totalorder %s23, 0
      %p86 = por %p84, %p85
      %p87 = scmp.ne.s32.totalorder %s75, %s76
      %p88 = scmp.eq.s32.totalorder %s24, 1
      %p89 = por %p87, %p88
      %p91 = scmp.ne.s32.totalorder %s76, %s90
      %p92 = scmp.eq.s32.totalorder %s24, 0
      %p93 = por %p91, %p92
      %s95 = sadd.s32 %s94, 1
      %p98 = scmp.eq.s32.totalorder %s18, 1
      %p99 = scmp.ne.s32.totalorder %s94, %s96
      %p100 = scmp.eq.s32.totalorder %s18, 0
      %p101 = por %p99, %p100
      %p102 = scmp.ne.s32.totalorder %s94, %s96
      %p103 = scmp.eq.s32.totalorder %s23, 1
      %p104 = por %p102, %p103
      %p105 = scmp.ne.s32.totalorder %s96, %s97
      %p106 = scmp.eq.s32.totalorder %s23, 0
      %p107 = por %p105, %p106
      %p108 = scmp.ne.s32.totalorder %s96, %s97
      %p109 = scmp.eq.s32.totalorder %s24, 1
      %p110 = por %p108, %p109
      %p112 = scmp.ne.s32.totalorder %s97, %s111
      %p113 = scmp.eq.s32.totalorder %s24, 0
      %p114 = por %p112, %p113
      %s116 = sadd.s32 %s115, 1
      %p119 = scmp.eq.s32.totalorder %s18, 1
      %p120 = scmp.ne.s32.totalorder %s115, %s117
      %p121 = scmp.eq.s32.totalorder %s18, 0
      %p122 = por %p120, %p121
      %p123 = scmp.ne.s32.totalorder %s115, %s117
      %p124 = scmp.eq.s32.totalorder %s23, 1
      %p125 = por %p123, %p124
      %p126 = scmp.ne.s32.totalorder %s117, %s118
      %p127 = scmp.eq.s32.totalorder %s23, 0
      %p128 = por %p126, %p127
      %p129 = scmp.ne.s32.totalorder %s117, %s118
      %p130 = scmp.eq.s32.totalorder %s24, 1
      %p131 = por %p129, %p130
      %p133 = scmp.ne.s32.totalorder %s118, %s132
      %p134 = scmp.eq.s32.totalorder %s24, 0
      %p135 = por %p133, %p134
      %s137 = sadd.s32 %s136, 1
      %p140 = scmp.eq.s32.totalorder %s18, 1
      %p141 = scmp.ne.s32.totalorder %s136, %s138
      %p142 = scmp.eq.s32.totalorder %s18, 0
      %p143 = por %p141, %p142
      %p144 = scmp.ne.s32.totalorder %s136, %s138
      %p145 = scmp.eq.s32.totalorder %s23, 1
      %p146 = por %p144, %p145
      %p147 = scmp.ne.s32.totalorder %s138, %s139
      %p148 = scmp.eq.s32.totalorder %s23, 0
      %p149 = por %p147, %p148
      %p150 = scmp.ne.s32.totalorder %s138, %s139
      %p151 = scmp.eq.s32.totalorder %s24, 1
      %p152 = por %p150, %p151
      %p154 = scmp.ne.s32.totalorder %s139, %s153
      %p155 = scmp.eq.s32.totalorder %s24, 0
      %p156 = por %p154, %p155
      %s158 = sadd.s32 %s157, 1
      %p161 = scmp.eq.s32.totalorder %s18, 1
      %p162 = scmp.ne.s32.totalorder %s157, %s159
      %p163 = scmp.eq.s32.totalorder %s18, 0
      %p164 = por %p162, %p163
      %p165 = scmp.ne.s32.totalorder %s157, %s159
      %p166 = scmp.eq.s32.totalorder %s23, 1
      %p167 = por %p165, %p166
      %p168 = scmp.ne.s32.totalorder %s159, %s160
      %p169 = scmp.eq.s32.totalorder %s23, 0
      %p170 = por %p168, %p169
      %p171 = scmp.ne.s32.totalorder %s159, %s160
      %p172 = scmp.eq.s32.totalorder %s24, 1
      %p173 = por %p171, %p172
      %p175 = scmp.ne.s32.totalorder %s160, %s174
      %p176 = scmp.eq.s32.totalorder %s24, 0
      %p177 = por %p175, %p176
      %s178 = ssub.s32 %s18, %s25
      %p179 = scmp.eq.s32.totalorder %s178, 0
      %s181 = sadd.s32 %s180, 1
      %s182 = scalar_select %p179, %s180, %s181
      %p185 = pneg %p179
      %p186 = scmp.eq.s32.totalorder %s18, 1
      %p187 = por %p185, %p186
      %p188 = scmp.ne.s32.totalorder %s180, %s183
      %p189 = scmp.eq.s32.totalorder %s18, 0
      %p190 = por %p188, %p189
      %p191 = scmp.ne.s32.totalorder %s180, %s183
      %p192 = scmp.eq.s32.totalorder %s23, 1
      %p193 = por %p191, %p192
      %p194 = scmp.ne.s32.totalorder %s183, %s184
      %p195 = scmp.eq.s32.totalorder %s23, 0
      %p196 = por %p194, %p195
      %p197 = scmp.ne.s32.totalorder %s183, %s184
      %p198 = scmp.eq.s32.totalorder %s24, 1
      %p199 = por %p197, %p198
      %p201 = scmp.ne.s32.totalorder %s184, %s200
      %p202 = scmp.eq.s32.totalorder %s24, 0
      %p203 = por %p201, %p202
      %p204 = scmp.le.s32.totalorder 1, %s18
      %p205 = scmp.lt.s32.totalorder %s18, 3
      %p206 = pnand %p204, %p205
      %p207 = pneg %p206
      // Predicated region
      $region9: #{tpu_custom_call.1} parent=5 // pred_check
        _
      $region10: #{tpu_custom_call.1} parent=5 // pred_check_branch
        %209 = sbr.rel (%p206) target = $region12
      $region11: #{tpu_custom_call.1} parent=5 // pred_region
        %s210 = ssub.s32 %s18, 1
        // Predicated region
        $region13: #{tpu_custom_call.1} parent=11 // pred_check
          %p211 = pneg %p65
        $region14: #{tpu_custom_call.1} parent=11 // pred_check_branch
          %213 = sbr.rel (%p211) target = $region16
        $region15: #{tpu_custom_call.1} parent=11 // pred_region
          _
        $region16: #{tpu_custom_call.1} parent=11 // pred_fallthru
          _
        // Predicated region
        $region17: #{tpu_custom_call.1} parent=11 // pred_check
          %p214 = pneg %p86
        $region18: #{tpu_custom_call.1} parent=11 // pred_check_branch
          %216 = sbr.rel (%p214) target = $region20
        $region19: #{tpu_custom_call.1} parent=11 // pred_region
          _
        $region20: #{tpu_custom_call.1} parent=11 // pred_fallthru
          _
        // Predicated region
        $region21: #{tpu_custom_call.1} parent=11 // pred_check
          %p217 = pneg %p107
        $region22: #{tpu_custom_call.1} parent=11 // pred_check_branch
          %219 = sbr.rel (%p217) target = $region24
        $region23: #{tpu_custom_call.1} parent=11 // pred_region
          _
        $region24: #{tpu_custom_call.1} parent=11 // pred_fallthru
          _
        // Predicated region
        $region25: #{tpu_custom_call.1} parent=11 // pred_check
          %p220 = pneg %p128
        $region26: #{tpu_custom_call.1} parent=11 // pred_check_branch
          %222 = sbr.rel (%p220) target = $region28
        $region27: #{tpu_custom_call.1} parent=11 // pred_region
          _
        $region28: #{tpu_custom_call.1} parent=11 // pred_fallthru
          _
        // Predicated region
        $region29: #{tpu_custom_call.1} parent=11 // pred_check
          %p223 = pneg %p149
        $region30: #{tpu_custom_call.1} parent=11 // pred_check_branch
          %225 = sbr.rel (%p223) target = $region32
        $region31: #{tpu_custom_call.1} parent=11 // pred_region
          _
        $region32: #{tpu_custom_call.1} parent=11 // pred_fallthru
          _
        // Predicated region
        $region33: #{tpu_custom_call.1} parent=11 // pred_check
          %p226 = pneg %p170
        $region34: #{tpu_custom_call.1} parent=11 // pred_check_branch
          %228 = sbr.rel (%p226) target = $region36
        $region35: #{tpu_custom_call.1} parent=11 // pred_region
          _
        $region36: #{tpu_custom_call.1} parent=11 // pred_fallthru
          _
      $region12: #{tpu_custom_call.1} parent=5 // pred_fallthru
        _
      %p229 = scmp.lt.s32.totalorder %s18, 2
      // Predicated region
      $region37: #{tpu_custom_call.1} parent=5 // pred_check
        %p230 = pneg %p229
      $region38: #{tpu_custom_call.1} parent=5 // pred_check_branch
        %232 = sbr.rel (%p230) target = $region40
      $region39: #{tpu_custom_call.1} parent=5 // pred_region
        // Predicated region
        $region41: #{tpu_custom_call.1} parent=39 // pred_check
          %p233 = pneg %p38
        $region42: #{tpu_custom_call.1} parent=39 // pred_check_branch
          %235 = sbr.rel (%p233) target = $region44
        $region43: #{tpu_custom_call.1} parent=39 // pred_region
          %s236 = smul.u32 64, %s18
          %p237 = scmp.lt.s32.totalorder %s236, 127
          %s238 = scalar_select %p237, %s236, 127
          %s239 = smul.addr %s238, 4
          %s240 = scalar_lea.vmem %s0, %s239
          %s241 = smul.u32 64, %s18
        $region44: #{tpu_custom_call.1} parent=39 // pred_fallthru
          _
      $region40: #{tpu_custom_call.1} parent=5 // pred_fallthru
        _
      %p242 = scmp.le.s32.totalorder 1, %s18
      %p243 = scmp.lt.s32.totalorder %s18, 3
      %p244 = pnand %p242, %p243
      %p245 = pneg %p244
      // Predicated region
      $region45: #{tpu_custom_call.1} parent=5 // pred_check
        _
      $region46: #{tpu_custom_call.1} parent=5 // pred_check_branch
        %247 = sbr.rel (%p244) target = $region48
      $region47: #{tpu_custom_call.1} parent=5 // pred_region
        %s248 = ssub.s32 %s18, 1
        %s249 = smul.u32 64, %s23
        %p250 = scmp.lt.s32.totalorder %s249, 127
        %s251 = scalar_select %p250, %s249, 127
        %s252 = smul.addr %s251, 4
        %s253 = scalar_lea.vmem %s0, %s252
        %p254 = pneg %p44
        %p255 = pneg %p41
        %p256 = pneg %p65
        %p257 = pneg %p62
        %p258 = pneg %p86
        %p259 = pneg %p83
        %p260 = pneg %p107
        %p261 = pneg %p104
        %p262 = pneg %p128
        %p263 = pneg %p125
        %p264 = pneg %p149
        %p265 = pneg %p146
        %p266 = pneg %p170
        %p267 = pneg %p167
        %p268 = pneg %p196
        %p269 = pneg %p193
        %s270 = sand.u32 %s183, 1
        %s271 = scalar_lea.sflag [#allocation4], %s270
        %s272 = sand.u32 %s183, 1
        %s273 = smul.addr %s272, 4
        %s274 = scalar_lea.vmem [#allocation3], %s273
        %s275 = smul.u32 64, %s23
        %p276 = scmp.lt.s32.totalorder %s275, 127
        %s277 = scalar_select %p276, %s275, 127
        %s278 = smul.addr %s277, 4
        %s279 = scalar_lea.vmem %s0, %s278
        %s280 = smul.u32 64, %s23
        %s281 = smul.u32 4, %s23
        %v283 = vld [vmem:[%s279] sm:$0xf]
        %v284 = vld [vmem:[%s279 + $0x4] sm:$0xf]
        %v285 = vld [vmem:[%s279 + $0x8] sm:$0xf]
        %v286 = vld [vmem:[%s279 + $0xc] sm:$0xf]
        %v287 = vld [vmem:[%s279 + $0x10] sm:$0xf]
        %v288 = vld [vmem:[%s279 + $0x14] sm:$0xf]
        %v289 = vld [vmem:[%s279 + $0x18] sm:$0xf]
        %v290 = vld [vmem:[%s279 + $0x1c] sm:$0xf]
        %v291 = vld [vmem:[%s279 + $0x20] sm:$0xf]
        %v292 = vld [vmem:[%s279 + $0x24] sm:$0xf]
        %v293 = vld [vmem:[%s279 + $0x28] sm:$0xf]
        %v294 = vld [vmem:[%s279 + $0x2c] sm:$0xf]
        %v295 = vld [vmem:[%s279 + $0x30] sm:$0xf]
        %v296 = vld [vmem:[%s279 + $0x34] sm:$0xf]
        %v297 = vld [vmem:[%s279 + $0x38] sm:$0xf]
        %v298 = vld [vmem:[%s279 + $0x3c] sm:$0xf]
        %v299 = vld [vmem:[%s279 + $0x40] sm:$0xf]
        %v300 = vld [vmem:[%s279 + $0x44] sm:$0xf]
        %v301 = vld [vmem:[%s279 + $0x48] sm:$0xf]
        %v302 = vld [vmem:[%s279 + $0x4c] sm:$0xf]
        %v303 = vld [vmem:[%s279 + $0x50] sm:$0xf]
        %v304 = vld [vmem:[%s279 + $0x54] sm:$0xf]
        %v305 = vld [vmem:[%s279 + $0x58] sm:$0xf]
        %v306 = vld [vmem:[%s279 + $0x5c] sm:$0xf]
        %v307 = vld [vmem:[%s279 + $0x60] sm:$0xf]
        %v308 = vld [vmem:[%s279 + $0x64] sm:$0xf]
        %v309 = vld [vmem:[%s279 + $0x68] sm:$0xf]
        %v310 = vld [vmem:[%s279 + $0x6c] sm:$0xf]
        %v311 = vld [vmem:[%s279 + $0x70] sm:$0xf]
        %v312 = vld [vmem:[%s279 + $0x74] sm:$0xf]
        %v313 = vld [vmem:[%s279 + $0x78] sm:$0xf]
        %v314 = vld [vmem:[%s279 + $0x7c] sm:$0xf]
        %v315 = vld [vmem:[%s279 + $0x80] sm:$0xf]
        %v316 = vld [vmem:[%s279 + $0x84] sm:$0xf]
        %v317 = vld [vmem:[%s279 + $0x88] sm:$0xf]
        %v318 = vld [vmem:[%s279 + $0x8c] sm:$0xf]
        %v319 = vld [vmem:[%s279 + $0x90] sm:$0xf]
        %v320 = vld [vmem:[%s279 + $0x94] sm:$0xf]
        %v321 = vld [vmem:[%s279 + $0x98] sm:$0xf]
        %v322 = vld [vmem:[%s279 + $0x9c] sm:$0xf]
        %v323 = vld [vmem:[%s279 + $0xa0] sm:$0xf]
        %v324 = vld [vmem:[%s279 + $0xa4] sm:$0xf]
        %v325 = vld [vmem:[%s279 + $0xa8] sm:$0xf]
        %v326 = vld [vmem:[%s279 + $0xac] sm:$0xf]
        %v327 = vld [vmem:[%s279 + $0xb0] sm:$0xf]
        %v328 = vld [vmem:[%s279 + $0xb4] sm:$0xf]
        %v329 = vld [vmem:[%s279 + $0xb8] sm:$0xf]
        %v330 = vld [vmem:[%s279 + $0xbc] sm:$0xf]
        %v331 = vld [vmem:[%s279 + $0xc0] sm:$0xf]
        %v332 = vld [vmem:[%s279 + $0xc4] sm:$0xf]
        %v333 = vld [vmem:[%s279 + $0xc8] sm:$0xf]
        %v334 = vld [vmem:[%s279 + $0xcc] sm:$0xf]
        %v335 = vld [vmem:[%s279 + $0xd0] sm:$0xf]
        %v336 = vld [vmem:[%s279 + $0xd4] sm:$0xf]
        %v337 = vld [vmem:[%s279 + $0xd8] sm:$0xf]
        %v338 = vld [vmem:[%s279 + $0xdc] sm:$0xf]
        %v339 = vld [vmem:[%s279 + $0xe0] sm:$0xf]
        %v340 = vld [vmem:[%s279 + $0xe4] sm:$0xf]
        %v341 = vld [vmem:[%s279 + $0xe8] sm:$0xf]
        %v342 = vld [vmem:[%s279 + $0xec] sm:$0xf]
        %v343 = vld [vmem:[%s279 + $0xf0] sm:$0xf]
        %v344 = vld [vmem:[%s279 + $0xf4] sm:$0xf]
        %v345 = vld [vmem:[%s279 + $0xf8] sm:$0xf]
        %v346 = vld [vmem:[%s279 + $0xfc] sm:$0xf]
        %v347 = vld [vmem:[%s1] sm:$0xf]
        %v348 = vld [vmem:[%s1 + $0x4] sm:$0xf]
        %v349 = vld [vmem:[%s2] sm:$0x1]
        %v351 = vperm.slane %v349, 0
        %v417 = vunpack.c.l.b16 %v283
        %v418 = vunpack.c.l.b16 %v284
        %v419 = vunpack.c.l.b16 %v285
        %v420 = vunpack.c.l.b16 %v286
        %v421 = vunpack.c.l.b16 %v287
        %v422 = vunpack.c.l.b16 %v288
        %v423 = vunpack.c.l.b16 %v289
        %v424 = vunpack.c.l.b16 %v290
        %v425 = vunpack.c.l.b16 %v291
        %v426 = vunpack.c.l.b16 %v292
        %v427 = vunpack.c.l.b16 %v293
        %v428 = vunpack.c.l.b16 %v294
        %v429 = vunpack.c.l.b16 %v295
        %v430 = vunpack.c.l.b16 %v296
        %v431 = vunpack.c.l.b16 %v297
        %v432 = vunpack.c.l.b16 %v298
        %v433 = vunpack.c.l.b16 %v299
        %v434 = vunpack.c.l.b16 %v300
        %v435 = vunpack.c.l.b16 %v301
        %v436 = vunpack.c.l.b16 %v302
        %v437 = vunpack.c.l.b16 %v303
        %v438 = vunpack.c.l.b16 %v304
        %v439 = vunpack.c.l.b16 %v305
        %v440 = vunpack.c.l.b16 %v306
        %v441 = vunpack.c.l.b16 %v307
        %v442 = vunpack.c.l.b16 %v308
        %v443 = vunpack.c.l.b16 %v309
        %v444 = vunpack.c.l.b16 %v310
        %v445 = vunpack.c.l.b16 %v311
        %v446 = vunpack.c.l.b16 %v312
        %v447 = vunpack.c.l.b16 %v313
        %v448 = vunpack.c.l.b16 %v314
        %v449 = vunpack.c.l.b16 %v315
        %v450 = vunpack.c.l.b16 %v316
        %v451 = vunpack.c.l.b16 %v317
        %v452 = vunpack.c.l.b16 %v318
        %v453 = vunpack.c.l.b16 %v319
        %v454 = vunpack.c.l.b16 %v320
        %v455 = vunpack.c.l.b16 %v321
        %v456 = vunpack.c.l.b16 %v322
        %v457 = vunpack.c.l.b16 %v323
        %v458 = vunpack.c.l.b16 %v324
        %v459 = vunpack.c.l.b16 %v325
        %v460 = vunpack.c.l.b16 %v326
        %v461 = vunpack.c.l.b16 %v327
        %v462 = vunpack.c.l.b16 %v328
        %v463 = vunpack.c.l.b16 %v329
        %v464 = vunpack.c.l.b16 %v330
        %v465 = vunpack.c.l.b16 %v331
        %v466 = vunpack.c.l.b16 %v332
        %v467 = vunpack.c.l.b16 %v333
        %v468 = vunpack.c.l.b16 %v334
        %v469 = vunpack.c.l.b16 %v335
        %v470 = vunpack.c.l.b16 %v336
        %v471 = vunpack.c.l.b16 %v337
        %v472 = vunpack.c.l.b16 %v338
        %v473 = vunpack.c.l.b16 %v339
        %v474 = vunpack.c.l.b16 %v340
        %v475 = vunpack.c.l.b16 %v341
        %v476 = vunpack.c.l.b16 %v342
        %v477 = vunpack.c.l.b16 %v343
        %v478 = vunpack.c.l.b16 %v344
        %v479 = vunpack.c.l.b16 %v345
        %v480 = vunpack.c.l.b16 %v346
        %v481 = vpack.c.b16 %v418, %v417
        %v482 = vpack.c.b16 %v420, %v419
        %v483 = vpack.c.b16 %v422, %v421
        %v484 = vpack.c.b16 %v424, %v423
        %v485 = vpack.c.b16 %v426, %v425
        %v486 = vpack.c.b16 %v428, %v427
        %v487 = vpack.c.b16 %v430, %v429
        %v488 = vpack.c.b16 %v432, %v431
        %v489 = vpack.c.b16 %v434, %v433
        %v490 = vpack.c.b16 %v436, %v435
        %v491 = vpack.c.b16 %v438, %v437
        %v492 = vpack.c.b16 %v440, %v439
        %v493 = vpack.c.b16 %v442, %v441
        %v494 = vpack.c.b16 %v444, %v443
        %v495 = vpack.c.b16 %v446, %v445
        %v496 = vpack.c.b16 %v448, %v447
        %v497 = vpack.c.b16 %v450, %v449
        %v498 = vpack.c.b16 %v452, %v451
        %v499 = vpack.c.b16 %v454, %v453
        %v500 = vpack.c.b16 %v456, %v455
        %v501 = vpack.c.b16 %v458, %v457
        %v502 = vpack.c.b16 %v460, %v459
        %v503 = vpack.c.b16 %v462, %v461
        %v504 = vpack.c.b16 %v464, %v463
        %v505 = vpack.c.b16 %v466, %v465
        %v506 = vpack.c.b16 %v468, %v467
        %v507 = vpack.c.b16 %v470, %v469
        %v508 = vpack.c.b16 %v472, %v471
        %v509 = vpack.c.b16 %v474, %v473
        %v510 = vpack.c.b16 %v476, %v475
        %v511 = vpack.c.b16 %v478, %v477
        %v512 = vpack.c.b16 %v480, %v479
        %v515 = vunpack.c.l.b16 %v347
        %v516 = vunpack.c.l.b16 %v348
        %v517 = vpack.c.b16 %v516, %v515
        %vm519 = vcmask 130048
        %v521 = vsel %vm519, %v481, 0
        %v524 = vsel %vm519, %v482, 0
        %v527 = vsel %vm519, %v483, 0
        %v530 = vsel %vm519, %v484, 0
        %v533 = vsel %vm519, %v485, 0
        %v536 = vsel %vm519, %v486, 0
        %v539 = vsel %vm519, %v487, 0
        %v542 = vsel %vm519, %v488, 0
        %v545 = vsel %vm519, %v489, 0
        %v548 = vsel %vm519, %v490, 0
        %v551 = vsel %vm519, %v491, 0
        %v554 = vsel %vm519, %v492, 0
        %v557 = vsel %vm519, %v493, 0
        %v560 = vsel %vm519, %v494, 0
        %v563 = vsel %vm519, %v495, 0
        %v566 = vsel %vm519, %v496, 0
        %v569 = vsel %vm519, %v497, 0
        %v572 = vsel %vm519, %v498, 0
        %v575 = vsel %vm519, %v499, 0
        %v578 = vsel %vm519, %v500, 0
        %v581 = vsel %vm519, %v501, 0
        %v584 = vsel %vm519, %v502, 0
        %v587 = vsel %vm519, %v503, 0
        %v590 = vsel %vm519, %v504, 0
        %v593 = vsel %vm519, %v505, 0
        %v596 = vsel %vm519, %v506, 0
        %v599 = vsel %vm519, %v507, 0
        %v602 = vsel %vm519, %v508, 0
        %v605 = vsel %vm519, %v509, 0
        %v608 = vsel %vm519, %v510, 0
        %v611 = vsel %vm519, %v511, 0
        %v614 = vsel %vm519, %v512, 0
        %616 = vmatpush.bf16.msra.mxu0 0
        %617 = vmatpush.bf16.msra.mxu0 0
        %618 = vmatpush.bf16.msra.mxu0 0
        %619 = vmatpush.bf16.msra.mxu0 0
        %620 = vmatpush.bf16.msra.mxu0 0
        %621 = vmatpush.bf16.msra.mxu0 0
        %622 = vmatpush.bf16.msra.mxu0 0
        %623 = vmatpush.bf16.msra.mxu0 %v517
        %624 = vmatmul.bf16.gmra.mxu0 %v521
        %v625 = vpop.f32.mrf.mxu0
        %v626 = vadd.f32 %v351, %v625
        %v627 = vpop.f32.mrf.mxu0
        %v628 = vadd.f32 %v351, %v627
        %629 = vmatmul.bf16.gmra.mxu0 %v524
        %v630 = vpop.f32.mrf.mxu0
        %v631 = vadd.f32 %v351, %v630
        %v632 = vpop.f32.mrf.mxu0
        %v633 = vadd.f32 %v351, %v632
        %634 = vmatmul.bf16.gmra.mxu0 %v527
        %v635 = vpop.f32.mrf.mxu0
        %v636 = vadd.f32 %v351, %v635
        %v637 = vpop.f32.mrf.mxu0
        %v638 = vadd.f32 %v351, %v637
        %639 = vmatmul.bf16.gmra.mxu0 %v530
        %v640 = vpop.f32.mrf.mxu0
        %v641 = vadd.f32 %v351, %v640
        %v642 = vpop.f32.mrf.mxu0
        %v643 = vadd.f32 %v351, %v642
        %644 = vmatmul.bf16.gmra.mxu0 %v533
        %v645 = vpop.f32.mrf.mxu0
        %v646 = vadd.f32 %v351, %v645
        %v647 = vpop.f32.mrf.mxu0
        %v648 = vadd.f32 %v351, %v647
        %649 = vmatmul.bf16.gmra.mxu0 %v536
        %v650 = vpop.f32.mrf.mxu0
        %v651 = vadd.f32 %v351, %v650
        %v652 = vpop.f32.mrf.mxu0
        %v653 = vadd.f32 %v351, %v652
        %654 = vmatmul.bf16.gmra.mxu0 %v539
        %v655 = vpop.f32.mrf.mxu0
        %v656 = vadd.f32 %v351, %v655
        %v657 = vpop.f32.mrf.mxu0
        %v658 = vadd.f32 %v351, %v657
        %659 = vmatmul.bf16.gmra.mxu0 %v542
        %v660 = vpop.f32.mrf.mxu0
        %v661 = vadd.f32 %v351, %v660
        %v662 = vpop.f32.mrf.mxu0
        %v663 = vadd.f32 %v351, %v662
        %664 = vmatmul.bf16.gmra.mxu0 %v545
        %v665 = vpop.f32.mrf.mxu0
        %v666 = vadd.f32 %v351, %v665
        %v667 = vpop.f32.mrf.mxu0
        %v668 = vadd.f32 %v351, %v667
        %669 = vmatmul.bf16.gmra.mxu0 %v548
        %v670 = vpop.f32.mrf.mxu0
        %v671 = vadd.f32 %v351, %v670
        %v672 = vpop.f32.mrf.mxu0
        %v673 = vadd.f32 %v351, %v672
        %674 = vmatmul.bf16.gmra.mxu0 %v551
        %v675 = vpop.f32.mrf.mxu0
        %v676 = vadd.f32 %v351, %v675
        %v677 = vpop.f32.mrf.mxu0
        %v678 = vadd.f32 %v351, %v677
        %679 = vmatmul.bf16.gmra.mxu0 %v554
        %v680 = vpop.f32.mrf.mxu0
        %v681 = vadd.f32 %v351, %v680
        %v682 = vpop.f32.mrf.mxu0
        %v683 = vadd.f32 %v351, %v682
        %684 = vmatmul.bf16.gmra.mxu0 %v557
        %v685 = vpop.f32.mrf.mxu0
        %v686 = vadd.f32 %v351, %v685
        %v687 = vpop.f32.mrf.mxu0
        %v688 = vadd.f32 %v351, %v687
        %689 = vmatmul.bf16.gmra.mxu0 %v560
        %v690 = vpop.f32.mrf.mxu0
        %v691 = vadd.f32 %v351, %v690
        %v692 = vpop.f32.mrf.mxu0
        %v693 = vadd.f32 %v351, %v692
        %694 = vmatmul.bf16.gmra.mxu0 %v563
        %v695 = vpop.f32.mrf.mxu0
        %v696 = vadd.f32 %v351, %v695
        %v697 = vpop.f32.mrf.mxu0
        %v698 = vadd.f32 %v351, %v697
        %699 = vmatmul.bf16.gmra.mxu0 %v566
        %v700 = vpop.f32.mrf.mxu0
        %v701 = vadd.f32 %v351, %v700
        %v702 = vpop.f32.mrf.mxu0
        %v703 = vadd.f32 %v351, %v702
        %704 = vmatmul.bf16.gmra.mxu0 %v569
        %v705 = vpop.f32.mrf.mxu0
        %v706 = vadd.f32 %v351, %v705
        %v707 = vpop.f32.mrf.mxu0
        %v708 = vadd.f32 %v351, %v707
        %709 = vmatmul.bf16.gmra.mxu0 %v572
        %v710 = vpop.f32.mrf.mxu0
        %v711 = vadd.f32 %v351, %v710
        %v712 = vpop.f32.mrf.mxu0
        %v713 = vadd.f32 %v351, %v712
        %714 = vmatmul.bf16.gmra.mxu0 %v575
        %v715 = vpop.f32.mrf.mxu0
        %v716 = vadd.f32 %v351, %v715
        %v717 = vpop.f32.mrf.mxu0
        %v718 = vadd.f32 %v351, %v717
        %719 = vmatmul.bf16.gmra.mxu0 %v578
        %v720 = vpop.f32.mrf.mxu0
        %v721 = vadd.f32 %v351, %v720
        %v722 = vpop.f32.mrf.mxu0
        %v723 = vadd.f32 %v351, %v722
        %724 = vmatmul.bf16.gmra.mxu0 %v581
        %v725 = vpop.f32.mrf.mxu0
        %v726 = vadd.f32 %v351, %v725
        %v727 = vpop.f32.mrf.mxu0
        %v728 = vadd.f32 %v351, %v727
        %729 = vmatmul.bf16.gmra.mxu0 %v584
        %v730 = vpop.f32.mrf.mxu0
        %v731 = vadd.f32 %v351, %v730
        %v732 = vpop.f32.mrf.mxu0
        %v733 = vadd.f32 %v351, %v732
        %734 = vmatmul.bf16.gmra.mxu0 %v587
        %v735 = vpop.f32.mrf.mxu0
        %v736 = vadd.f32 %v351, %v735
        %v737 = vpop.f32.mrf.mxu0
        %v738 = vadd.f32 %v351, %v737
        %739 = vmatmul.bf16.gmra.mxu0 %v590
        %v740 = vpop.f32.mrf.mxu0
        %v741 = vadd.f32 %v351, %v740
        %v742 = vpop.f32.mrf.mxu0
        %v743 = vadd.f32 %v351, %v742
        %744 = vmatmul.bf16.gmra.mxu0 %v593
        %v745 = vpop.f32.mrf.mxu0
        %v746 = vadd.f32 %v351, %v745
        %v747 = vpop.f32.mrf.mxu0
        %v748 = vadd.f32 %v351, %v747
        %749 = vmatmul.bf16.gmra.mxu0 %v596
        %v750 = vpop.f32.mrf.mxu0
        %v751 = vadd.f32 %v351, %v750
        %v752 = vpop.f32.mrf.mxu0
        %v753 = vadd.f32 %v351, %v752
        %754 = vmatmul.bf16.gmra.mxu0 %v599
        %v755 = vpop.f32.mrf.mxu0
        %v756 = vadd.f32 %v351, %v755
        %v757 = vpop.f32.mrf.mxu0
        %v758 = vadd.f32 %v351, %v757
        %759 = vmatmul.bf16.gmra.mxu0 %v602
        %v760 = vpop.f32.mrf.mxu0
        %v761 = vadd.f32 %v351, %v760
        %v762 = vpop.f32.mrf.mxu0
        %v763 = vadd.f32 %v351, %v762
        %764 = vmatmul.bf16.gmra.mxu0 %v605
        %v765 = vpop.f32.mrf.mxu0
        %v766 = vadd.f32 %v351, %v765
        %v767 = vpop.f32.mrf.mxu0
        %v768 = vadd.f32 %v351, %v767
        %769 = vmatmul.bf16.gmra.mxu0 %v608
        %v770 = vpop.f32.mrf.mxu0
        %v771 = vadd.f32 %v351, %v770
        %v772 = vpop.f32.mrf.mxu0
        %v773 = vadd.f32 %v351, %v772
        %774 = vmatmul.bf16.gmra.mxu0 %v611
        %v775 = vpop.f32.mrf.mxu0
        %v776 = vadd.f32 %v351, %v775
        %v777 = vpop.f32.mrf.mxu0
        %v778 = vadd.f32 %v351, %v777
        %779 = vmatmul.bf16.gmra.mxu0 %v614
        %v780 = vpop.f32.mrf.mxu0
        %v781 = vadd.f32 %v351, %v780
        %v782 = vpop.f32.mrf.mxu0
        %v783 = vadd.f32 %v351, %v782
        %784 = vdwg.mxu0
        %v785 = vmax.f32 %v626, 0.0
        %v786 = vmax.f32 %v628, 0.0
        %v787 = vmax.f32 %v631, 0.0
        %v788 = vmax.f32 %v633, 0.0
        %v789 = vmax.f32 %v636, 0.0
        %v790 = vmax.f32 %v638, 0.0
        %v791 = vmax.f32 %v641, 0.0
        %v792 = vmax.f32 %v643, 0.0
        %v793 = vmax.f32 %v646, 0.0
        %v794 = vmax.f32 %v648, 0.0
        %v795 = vmax.f32 %v651, 0.0
        %v796 = vmax.f32 %v653, 0.0
        %v797 = vmax.f32 %v656, 0.0
        %v798 = vmax.f32 %v658, 0.0
        %v799 = vmax.f32 %v661, 0.0
        %v800 = vmax.f32 %v663, 0.0
        %v801 = vmax.f32 %v666, 0.0
        %v802 = vmax.f32 %v668, 0.0
        %v803 = vmax.f32 %v671, 0.0
        %v804 = vmax.f32 %v673, 0.0
        %v805 = vmax.f32 %v676, 0.0
        %v806 = vmax.f32 %v678, 0.0
        %v807 = vmax.f32 %v681, 0.0
        %v808 = vmax.f32 %v683, 0.0
        %v809 = vmax.f32 %v686, 0.0
        %v810 = vmax.f32 %v688, 0.0
        %v811 = vmax.f32 %v691, 0.0
        %v812 = vmax.f32 %v693, 0.0
        %v813 = vmax.f32 %v696, 0.0
        %v814 = vmax.f32 %v698, 0.0
        %v815 = vmax.f32 %v701, 0.0
        %v816 = vmax.f32 %v703, 0.0
        %v817 = vmax.f32 %v706, 0.0
        %v818 = vmax.f32 %v708, 0.0
        %v819 = vmax.f32 %v711, 0.0
        %v820 = vmax.f32 %v713, 0.0
        %v821 = vmax.f32 %v716, 0.0
        %v822 = vmax.f32 %v718, 0.0
        %v823 = vmax.f32 %v721, 0.0
        %v824 = vmax.f32 %v723, 0.0
        %v825 = vmax.f32 %v726, 0.0
        %v826 = vmax.f32 %v728, 0.0
        %v827 = vmax.f32 %v731, 0.0
        %v828 = vmax.f32 %v733, 0.0
        %v829 = vmax.f32 %v736, 0.0
        %v830 = vmax.f32 %v738, 0.0
        %v831 = vmax.f32 %v741, 0.0
        %v832 = vmax.f32 %v743, 0.0
        %v833 = vmax.f32 %v746, 0.0
        %v834 = vmax.f32 %v748, 0.0
        %v835 = vmax.f32 %v751, 0.0
        %v836 = vmax.f32 %v753, 0.0
        %v837 = vmax.f32 %v756, 0.0
        %v838 = vmax.f32 %v758, 0.0
        %v839 = vmax.f32 %v761, 0.0
        %v840 = vmax.f32 %v763, 0.0
        %v841 = vmax.f32 %v766, 0.0
        %v842 = vmax.f32 %v768, 0.0
        %v843 = vmax.f32 %v771, 0.0
        %v844 = vmax.f32 %v773, 0.0
        %v845 = vmax.f32 %v776, 0.0
        %v846 = vmax.f32 %v778, 0.0
        %v847 = vmax.f32 %v781, 0.0
        %v848 = vmax.f32 %v783, 0.0
        %v849 = vpack.c.bf16 %v786, %v785
        %v850 = vpack.c.bf16 %v788, %v787
        %v851 = vpack.c.bf16 %v790, %v789
        %v852 = vpack.c.bf16 %v792, %v791
        %v853 = vpack.c.bf16 %v794, %v793
        %v854 = vpack.c.bf16 %v796, %v795
        %v855 = vpack.c.bf16 %v798, %v797
        %v856 = vpack.c.bf16 %v800, %v799
        %v857 = vpack.c.bf16 %v802, %v801
        %v858 = vpack.c.bf16 %v804, %v803
        %v859 = vpack.c.bf16 %v806, %v805
        %v860 = vpack.c.bf16 %v808, %v807
        %v861 = vpack.c.bf16 %v810, %v809
        %v862 = vpack.c.bf16 %v812, %v811
        %v863 = vpack.c.bf16 %v814, %v813
        %v864 = vpack.c.bf16 %v816, %v815
        %v865 = vpack.c.bf16 %v818, %v817
        %v866 = vpack.c.bf16 %v820, %v819
        %v867 = vpack.c.bf16 %v822, %v821
        %v868 = vpack.c.bf16 %v824, %v823
        %v869 = vpack.c.bf16 %v826, %v825
        %v870 = vpack.c.bf16 %v828, %v827
        %v871 = vpack.c.bf16 %v830, %v829
        %v872 = vpack.c.bf16 %v832, %v831
        %v873 = vpack.c.bf16 %v834, %v833
        %v874 = vpack.c.bf16 %v836, %v835
        %v875 = vpack.c.bf16 %v838, %v837
        %v876 = vpack.c.bf16 %v840, %v839
        %v877 = vpack.c.bf16 %v842, %v841
        %v878 = vpack.c.bf16 %v844, %v843
        %v879 = vpack.c.bf16 %v846, %v845
        %v880 = vpack.c.bf16 %v848, %v847
        %v881 = vld [vmem:[%s3] sm:$0xf]
        %v882 = vld [vmem:[%s3 + $0x4] sm:$0xf]
        %v883 = vld [vmem:[%s3 + $0x8] sm:$0xf]
        %v884 = vld [vmem:[%s3 + $0xc] sm:$0xf]
        %v885 = vld [vmem:[%s4] sm:$0x1]
        %v887 = vperm.slane %v885, 0
        %v893 = vunpack.c.l.b16 %v881
        %v894 = vunpack.c.l.b16 %v882
        %v895 = vunpack.c.l.b16 %v883
        %v896 = vunpack.c.l.b16 %v884
        %v897 = vpack.c.b16 %v894, %v893
        %v898 = vpack.c.b16 %v896, %v895
        %vm901 = vcmask 261120
        %v903 = vsel %vm901, %v849, 0
        %v906 = vsel %vm901, %v850, 0
        %v909 = vsel %vm901, %v851, 0
        %v912 = vsel %vm901, %v852, 0
        %v915 = vsel %vm901, %v853, 0
        %v918 = vsel %vm901, %v854, 0
        %v921 = vsel %vm901, %v855, 0
        %v924 = vsel %vm901, %v856, 0
        %v927 = vsel %vm901, %v857, 0
        %v930 = vsel %vm901, %v858, 0
        %v933 = vsel %vm901, %v859, 0
        %v936 = vsel %vm901, %v860, 0
        %v939 = vsel %vm901, %v861, 0
        %v942 = vsel %vm901, %v862, 0
        %v945 = vsel %vm901, %v863, 0
        %v948 = vsel %vm901, %v864, 0
        %v951 = vsel %vm901, %v865, 0
        %v954 = vsel %vm901, %v866, 0
        %v957 = vsel %vm901, %v867, 0
        %v960 = vsel %vm901, %v868, 0
        %v963 = vsel %vm901, %v869, 0
        %v966 = vsel %vm901, %v870, 0
        %v969 = vsel %vm901, %v871, 0
        %v972 = vsel %vm901, %v872, 0
        %v975 = vsel %vm901, %v873, 0
        %v978 = vsel %vm901, %v874, 0
        %v981 = vsel %vm901, %v875, 0
        %v984 = vsel %vm901, %v876, 0
        %v987 = vsel %vm901, %v877, 0
        %v990 = vsel %vm901, %v878, 0
        %v993 = vsel %vm901, %v879, 0
        %v996 = vsel %vm901, %v880, 0
        %998 = vmatpush.bf16.msra.mxu0 0
        %999 = vmatpush.bf16.msra.mxu0 0
        %1000 = vmatpush.bf16.msra.mxu0 0
        %1001 = vmatpush.bf16.msra.mxu0 0
        %1002 = vmatpush.bf16.msra.mxu0 0
        %1003 = vmatpush.bf16.msra.mxu0 0
        %1004 = vmatpush.bf16.msra.mxu0 %v898
        %1005 = vmatpush.bf16.msra.mxu0 %v897
        %1006 = vmatmul.bf16.gmra.mxu0 %v903
        %v1007 = vpop.f32.mrf.mxu0
        %v1008 = vadd.f32 %v887, %v1007
        %v1009 = vpop.f32.mrf.mxu0
        %v1010 = vadd.f32 %v887, %v1009
        %1011 = vmatmul.bf16.gmra.mxu0 %v906
        %v1012 = vpop.f32.mrf.mxu0
        %v1013 = vadd.f32 %v887, %v1012
        %v1014 = vpop.f32.mrf.mxu0
        %v1015 = vadd.f32 %v887, %v1014
        %1016 = vmatmul.bf16.gmra.mxu0 %v909
        %v1017 = vpop.f32.mrf.mxu0
        %v1018 = vadd.f32 %v887, %v1017
        %v1019 = vpop.f32.mrf.mxu0
        %v1020 = vadd.f32 %v887, %v1019
        %1021 = vmatmul.bf16.gmra.mxu0 %v912
        %v1022 = vpop.f32.mrf.mxu0
        %v1023 = vadd.f32 %v887, %v1022
        %v1024 = vpop.f32.mrf.mxu0
        %v1025 = vadd.f32 %v887, %v1024
        %1026 = vmatmul.bf16.gmra.mxu0 %v915
        %v1027 = vpop.f32.mrf.mxu0
        %v1028 = vadd.f32 %v887, %v1027
        %v1029 = vpop.f32.mrf.mxu0
        %v1030 = vadd.f32 %v887, %v1029
        %1031 = vmatmul.bf16.gmra.mxu0 %v918
        %v1032 = vpop.f32.mrf.mxu0
        %v1033 = vadd.f32 %v887, %v1032
        %v1034 = vpop.f32.mrf.mxu0
        %v1035 = vadd.f32 %v887, %v1034
        %1036 = vmatmul.bf16.gmra.mxu0 %v921
        %v1037 = vpop.f32.mrf.mxu0
        %v1038 = vadd.f32 %v887, %v1037
        %v1039 = vpop.f32.mrf.mxu0
        %v1040 = vadd.f32 %v887, %v1039
        %1041 = vmatmul.bf16.gmra.mxu0 %v924
        %v1042 = vpop.f32.mrf.mxu0
        %v1043 = vadd.f32 %v887, %v1042
        %v1044 = vpop.f32.mrf.mxu0
        %v1045 = vadd.f32 %v887, %v1044
        %1046 = vmatmul.bf16.gmra.mxu0 %v927
        %v1047 = vpop.f32.mrf.mxu0
        %v1048 = vadd.f32 %v887, %v1047
        %v1049 = vpop.f32.mrf.mxu0
        %v1050 = vadd.f32 %v887, %v1049
        %1051 = vmatmul.bf16.gmra.mxu0 %v930
        %v1052 = vpop.f32.mrf.mxu0
        %v1053 = vadd.f32 %v887, %v1052
        %v1054 = vpop.f32.mrf.mxu0
        %v1055 = vadd.f32 %v887, %v1054
        %1056 = vmatmul.bf16.gmra.mxu0 %v933
        %v1057 = vpop.f32.mrf.mxu0
        %v1058 = vadd.f32 %v887, %v1057
        %v1059 = vpop.f32.mrf.mxu0
        %v1060 = vadd.f32 %v887, %v1059
        %1061 = vmatmul.bf16.gmra.mxu0 %v936
        %v1062 = vpop.f32.mrf.mxu0
        %v1063 = vadd.f32 %v887, %v1062
        %v1064 = vpop.f32.mrf.mxu0
        %v1065 = vadd.f32 %v887, %v1064
        %1066 = vmatmul.bf16.gmra.mxu0 %v939
        %v1067 = vpop.f32.mrf.mxu0
        %v1068 = vadd.f32 %v887, %v1067
        %v1069 = vpop.f32.mrf.mxu0
        %v1070 = vadd.f32 %v887, %v1069
        %1071 = vmatmul.bf16.gmra.mxu0 %v942
        %v1072 = vpop.f32.mrf.mxu0
        %v1073 = vadd.f32 %v887, %v1072
        %v1074 = vpop.f32.mrf.mxu0
        %v1075 = vadd.f32 %v887, %v1074
        %1076 = vmatmul.bf16.gmra.mxu0 %v945
        %v1077 = vpop.f32.mrf.mxu0
        %v1078 = vadd.f32 %v887, %v1077
        %v1079 = vpop.f32.mrf.mxu0
        %v1080 = vadd.f32 %v887, %v1079
        %1081 = vmatmul.bf16.gmra.mxu0 %v948
        %v1082 = vpop.f32.mrf.mxu0
        %v1083 = vadd.f32 %v887, %v1082
        %v1084 = vpop.f32.mrf.mxu0
        %v1085 = vadd.f32 %v887, %v1084
        %1086 = vmatmul.bf16.gmra.mxu0 %v951
        %v1087 = vpop.f32.mrf.mxu0
        %v1088 = vadd.f32 %v887, %v1087
        %v1089 = vpop.f32.mrf.mxu0
        %v1090 = vadd.f32 %v887, %v1089
        %1091 = vmatmul.bf16.gmra.mxu0 %v954
        %v1092 = vpop.f32.mrf.mxu0
        %v1093 = vadd.f32 %v887, %v1092
        %v1094 = vpop.f32.mrf.mxu0
        %v1095 = vadd.f32 %v887, %v1094
        %1096 = vmatmul.bf16.gmra.mxu0 %v957
        %v1097 = vpop.f32.mrf.mxu0
        %v1098 = vadd.f32 %v887, %v1097
        %v1099 = vpop.f32.mrf.mxu0
        %v1100 = vadd.f32 %v887, %v1099
        %1101 = vmatmul.bf16.gmra.mxu0 %v960
        %v1102 = vpop.f32.mrf.mxu0
        %v1103 = vadd.f32 %v887, %v1102
        %v1104 = vpop.f32.mrf.mxu0
        %v1105 = vadd.f32 %v887, %v1104
        %1106 = vmatmul.bf16.gmra.mxu0 %v963
        %v1107 = vpop.f32.mrf.mxu0
        %v1108 = vadd.f32 %v887, %v1107
        %v1109 = vpop.f32.mrf.mxu0
        %v1110 = vadd.f32 %v887, %v1109
        %1111 = vmatmul.bf16.gmra.mxu0 %v966
        %v1112 = vpop.f32.mrf.mxu0
        %v1113 = vadd.f32 %v887, %v1112
        %v1114 = vpop.f32.mrf.mxu0
        %v1115 = vadd.f32 %v887, %v1114
        %1116 = vmatmul.bf16.gmra.mxu0 %v969
        %v1117 = vpop.f32.mrf.mxu0
        %v1118 = vadd.f32 %v887, %v1117
        %v1119 = vpop.f32.mrf.mxu0
        %v1120 = vadd.f32 %v887, %v1119
        %1121 = vmatmul.bf16.gmra.mxu0 %v972
        %v1122 = vpop.f32.mrf.mxu0
        %v1123 = vadd.f32 %v887, %v1122
        %v1124 = vpop.f32.mrf.mxu0
        %v1125 = vadd.f32 %v887, %v1124
        %1126 = vmatmul.bf16.gmra.mxu0 %v975
        %v1127 = vpop.f32.mrf.mxu0
        %v1128 = vadd.f32 %v887, %v1127
        %v1129 = vpop.f32.mrf.mxu0
        %v1130 = vadd.f32 %v887, %v1129
        %1131 = vmatmul.bf16.gmra.mxu0 %v978
        %v1132 = vpop.f32.mrf.mxu0
        %v1133 = vadd.f32 %v887, %v1132
        %v1134 = vpop.f32.mrf.mxu0
        %v1135 = vadd.f32 %v887, %v1134
        %1136 = vmatmul.bf16.gmra.mxu0 %v981
        %v1137 = vpop.f32.mrf.mxu0
        %v1138 = vadd.f32 %v887, %v1137
        %v1139 = vpop.f32.mrf.mxu0
        %v1140 = vadd.f32 %v887, %v1139
        %1141 = vmatmul.bf16.gmra.mxu0 %v984
        %v1142 = vpop.f32.mrf.mxu0
        %v1143 = vadd.f32 %v887, %v1142
        %v1144 = vpop.f32.mrf.mxu0
        %v1145 = vadd.f32 %v887, %v1144
        %1146 = vmatmul.bf16.gmra.mxu0 %v987
        %v1147 = vpop.f32.mrf.mxu0
        %v1148 = vadd.f32 %v887, %v1147
        %v1149 = vpop.f32.mrf.mxu0
        %v1150 = vadd.f32 %v887, %v1149
        %1151 = vmatmul.bf16.gmra.mxu0 %v990
        %v1152 = vpop.f32.mrf.mxu0
        %v1153 = vadd.f32 %v887, %v1152
        %v1154 = vpop.f32.mrf.mxu0
        %v1155 = vadd.f32 %v887, %v1154
        %1156 = vmatmul.bf16.gmra.mxu0 %v993
        %v1157 = vpop.f32.mrf.mxu0
        %v1158 = vadd.f32 %v887, %v1157
        %v1159 = vpop.f32.mrf.mxu0
        %v1160 = vadd.f32 %v887, %v1159
        %1161 = vmatmul.bf16.gmra.mxu0 %v996
        %v1162 = vpop.f32.mrf.mxu0
        %v1163 = vadd.f32 %v887, %v1162
        %v1164 = vpop.f32.mrf.mxu0
        %v1165 = vadd.f32 %v887, %v1164
        %1166 = vdwg.mxu0
        %v1167 = vmax.f32 %v1008, 0.0
        %v1168 = vmax.f32 %v1010, 0.0
        %v1169 = vmax.f32 %v1013, 0.0
        %v1170 = vmax.f32 %v1015, 0.0
        %v1171 = vmax.f32 %v1018, 0.0
        %v1172 = vmax.f32 %v1020, 0.0
        %v1173 = vmax.f32 %v1023, 0.0
        %v1174 = vmax.f32 %v1025, 0.0
        %v1175 = vmax.f32 %v1028, 0.0
        %v1176 = vmax.f32 %v1030, 0.0
        %v1177 = vmax.f32 %v1033, 0.0
        %v1178 = vmax.f32 %v1035, 0.0
        %v1179 = vmax.f32 %v1038, 0.0
        %v1180 = vmax.f32 %v1040, 0.0
        %v1181 = vmax.f32 %v1043, 0.0
        %v1182 = vmax.f32 %v1045, 0.0
        %v1183 = vmax.f32 %v1048, 0.0
        %v1184 = vmax.f32 %v1050, 0.0
        %v1185 = vmax.f32 %v1053, 0.0
        %v1186 = vmax.f32 %v1055, 0.0
        %v1187 = vmax.f32 %v1058, 0.0
        %v1188 = vmax.f32 %v1060, 0.0
        %v1189 = vmax.f32 %v1063, 0.0
        %v1190 = vmax.f32 %v1065, 0.0
        %v1191 = vmax.f32 %v1068, 0.0
        %v1192 = vmax.f32 %v1070, 0.0
        %v1193 = vmax.f32 %v1073, 0.0
        %v1194 = vmax.f32 %v1075, 0.0
        %v1195 = vmax.f32 %v1078, 0.0
        %v1196 = vmax.f32 %v1080, 0.0
        %v1197 = vmax.f32 %v1083, 0.0
        %v1198 = vmax.f32 %v1085, 0.0
        %v1199 = vmax.f32 %v1088, 0.0
        %v1200 = vmax.f32 %v1090, 0.0
        %v1201 = vmax.f32 %v1093, 0.0
        %v1202 = vmax.f32 %v1095, 0.0
        %v1203 = vmax.f32 %v1098, 0.0
        %v1204 = vmax.f32 %v1100, 0.0
        %v1205 = vmax.f32 %v1103, 0.0
        %v1206 = vmax.f32 %v1105, 0.0
        %v1207 = vmax.f32 %v1108, 0.0
        %v1208 = vmax.f32 %v1110, 0.0
        %v1209 = vmax.f32 %v1113, 0.0
        %v1210 = vmax.f32 %v1115, 0.0
        %v1211 = vmax.f32 %v1118, 0.0
        %v1212 = vmax.f32 %v1120, 0.0
        %v1213 = vmax.f32 %v1123, 0.0
        %v1214 = vmax.f32 %v1125, 0.0
        %v1215 = vmax.f32 %v1128, 0.0
        %v1216 = vmax.f32 %v1130, 0.0
        %v1217 = vmax.f32 %v1133, 0.0
        %v1218 = vmax.f32 %v1135, 0.0
        %v1219 = vmax.f32 %v1138, 0.0
        %v1220 = vmax.f32 %v1140, 0.0
        %v1221 = vmax.f32 %v1143, 0.0
        %v1222 = vmax.f32 %v1145, 0.0
        %v1223 = vmax.f32 %v1148, 0.0
        %v1224 = vmax.f32 %v1150, 0.0
        %v1225 = vmax.f32 %v1153, 0.0
        %v1226 = vmax.f32 %v1155, 0.0
        %v1227 = vmax.f32 %v1158, 0.0
        %v1228 = vmax.f32 %v1160, 0.0
        %v1229 = vmax.f32 %v1163, 0.0
        %v1230 = vmax.f32 %v1165, 0.0
        %v1231 = vpack.c.bf16 %v1168, %v1167
        %v1232 = vpack.c.bf16 %v1170, %v1169
        %v1233 = vpack.c.bf16 %v1172, %v1171
        %v1234 = vpack.c.bf16 %v1174, %v1173
        %v1235 = vpack.c.bf16 %v1176, %v1175
        %v1236 = vpack.c.bf16 %v1178, %v1177
        %v1237 = vpack.c.bf16 %v1180, %v1179
        %v1238 = vpack.c.bf16 %v1182, %v1181
        %v1239 = vpack.c.bf16 %v1184, %v1183
        %v1240 = vpack.c.bf16 %v1186, %v1185
        %v1241 = vpack.c.bf16 %v1188, %v1187
        %v1242 = vpack.c.bf16 %v1190, %v1189
        %v1243 = vpack.c.bf16 %v1192, %v1191
        %v1244 = vpack.c.bf16 %v1194, %v1193
        %v1245 = vpack.c.bf16 %v1196, %v1195
        %v1246 = vpack.c.bf16 %v1198, %v1197
        %v1247 = vpack.c.bf16 %v1200, %v1199
        %v1248 = vpack.c.bf16 %v1202, %v1201
        %v1249 = vpack.c.bf16 %v1204, %v1203
        %v1250 = vpack.c.bf16 %v1206, %v1205
        %v1251 = vpack.c.bf16 %v1208, %v1207
        %v1252 = vpack.c.bf16 %v1210, %v1209
        %v1253 = vpack.c.bf16 %v1212, %v1211
        %v1254 = vpack.c.bf16 %v1214, %v1213
        %v1255 = vpack.c.bf16 %v1216, %v1215
        %v1256 = vpack.c.bf16 %v1218, %v1217
        %v1257 = vpack.c.bf16 %v1220, %v1219
        %v1258 = vpack.c.bf16 %v1222, %v1221
        %v1259 = vpack.c.bf16 %v1224, %v1223
        %v1260 = vpack.c.bf16 %v1226, %v1225
        %v1261 = vpack.c.bf16 %v1228, %v1227
        %v1262 = vpack.c.bf16 %v1230, %v1229
        %v1263 = vld [vmem:[%s5] sm:$0x1]
        %v1264 = vld [vmem:[#allocation2] sm:$0x1]
        %1266 = vset.pattern.permute.xlu0 0
        %1267 = vperm.xlu0 %1266, %v1264
        %v1268 = vpop.permute.xlu0 %1267
        %v1270 = vperm.slane %v1268, 0
        %v1272 = vsel %vm901, %v1263, 0
        %v1275 = vsel %vm901, %v1231, 0
        %v1278 = vsel %vm901, %v1232, 0
        %v1281 = vsel %vm901, %v1233, 0
        %v1284 = vsel %vm901, %v1234, 0
        %v1287 = vsel %vm901, %v1235, 0
        %v1290 = vsel %vm901, %v1236, 0
        %v1293 = vsel %vm901, %v1237, 0
        %v1296 = vsel %vm901, %v1238, 0
        %v1299 = vsel %vm901, %v1239, 0
        %v1302 = vsel %vm901, %v1240, 0
        %v1305 = vsel %vm901, %v1241, 0
        %v1308 = vsel %vm901, %v1242, 0
        %v1311 = vsel %vm901, %v1243, 0
        %v1314 = vsel %vm901, %v1244, 0
        %v1317 = vsel %vm901, %v1245, 0
        %v1320 = vsel %vm901, %v1246, 0
        %v1323 = vsel %vm901, %v1247, 0
        %v1326 = vsel %vm901, %v1248, 0
        %v1329 = vsel %vm901, %v1249, 0
        %v1332 = vsel %vm901, %v1250, 0
        %v1335 = vsel %vm901, %v1251, 0
        %v1338 = vsel %vm901, %v1252, 0
        %v1341 = vsel %vm901, %v1253, 0
        %v1344 = vsel %vm901, %v1254, 0
        %v1347 = vsel %vm901, %v1255, 0
        %v1350 = vsel %vm901, %v1256, 0
        %v1353 = vsel %vm901, %v1257, 0
        %v1356 = vsel %vm901, %v1258, 0
        %v1359 = vsel %vm901, %v1259, 0
        %v1362 = vsel %vm901, %v1260, 0
        %v1365 = vsel %vm901, %v1261, 0
        %v1368 = vsel %vm901, %v1262, 0
        %1370 = vmatpush.bf16.xpose.msra.mxu0 %v1296
        %1371 = vmatpush.bf16.xpose.msra.mxu0 %v1293
        %1372 = vmatpush.bf16.xpose.msra.mxu0 %v1290
        %1373 = vmatpush.bf16.xpose.msra.mxu0 %v1287
        %1374 = vmatpush.bf16.xpose.msra.mxu0 %v1284
        %1375 = vmatpush.bf16.xpose.msra.mxu0 %v1281
        %1376 = vmatpush.bf16.xpose.msra.mxu0 %v1278
        %1377 = vmatpush.bf16.xpose.msra.mxu0 %v1275
        %1378 = vmatmul.bf16.gmra.mxu0 %v1272
        %v1379 = vpop.f32.mrf.mxu0
        %v1380 = vadd.f32 %v1270, %v1379
        %v1381 = vpop.f32.mrf.mxu0
        %1382 = vdwg.mxu0
        %1383 = vmatpush.bf16.xpose.msra.mxu0 %v1320
        %1384 = vmatpush.bf16.xpose.msra.mxu0 %v1317
        %1385 = vmatpush.bf16.xpose.msra.mxu0 %v1314
        %1386 = vmatpush.bf16.xpose.msra.mxu0 %v1311
        %1387 = vmatpush.bf16.xpose.msra.mxu0 %v1308
        %1388 = vmatpush.bf16.xpose.msra.mxu0 %v1305
        %1389 = vmatpush.bf16.xpose.msra.mxu0 %v1302
        %1390 = vmatpush.bf16.xpose.msra.mxu0 %v1299
        %1391 = vmatmul.bf16.gmra.mxu0 %v1272
        %v1392 = vpop.f32.mrf.mxu0
        %v1393 = vadd.f32 %v1270, %v1392
        %v1394 = vpop.f32.mrf.mxu0
        %1395 = vdwg.mxu0
        %1396 = vmatpush.bf16.xpose.msra.mxu0 %v1344
        %1397 = vmatpush.bf16.xpose.msra.mxu0 %v1341
        %1398 = vmatpush.bf16.xpose.msra.mxu0 %v1338
        %1399 = vmatpush.bf16.xpose.msra.mxu0 %v1335
        %1400 = vmatpush.bf16.xpose.msra.mxu0 %v1332
        %1401 = vmatpush.bf16.xpose.msra.mxu0 %v1329
        %1402 = vmatpush.bf16.xpose.msra.mxu0 %v1326
        %1403 = vmatpush.bf16.xpose.msra.mxu0 %v1323
        %1404 = vmatmul.bf16.gmra.mxu0 %v1272
        %v1405 = vpop.f32.mrf.mxu0
        %v1406 = vadd.f32 %v1270, %v1405
        %v1407 = vpop.f32.mrf.mxu0
        %1408 = vdwg.mxu0
        %1409 = vmatpush.bf16.xpose.msra.mxu0 %v1368
        %1410 = vmatpush.bf16.xpose.msra.mxu0 %v1365
        %1411 = vmatpush.bf16.xpose.msra.mxu0 %v1362
        %1412 = vmatpush.bf16.xpose.msra.mxu0 %v1359
        %1413 = vmatpush.bf16.xpose.msra.mxu0 %v1356
        %1414 = vmatpush.bf16.xpose.msra.mxu0 %v1353
        %1415 = vmatpush.bf16.xpose.msra.mxu0 %v1350
        %1416 = vmatpush.bf16.xpose.msra.mxu0 %v1347
        %1417 = vmatmul.bf16.gmra.mxu0 %v1272
        %v1418 = vpop.f32.mrf.mxu0
        %v1419 = vadd.f32 %v1270, %v1418
        %v1420 = vpop.f32.mrf.mxu0
        %1421 = vdwg.mxu0
        %v1426 = vrot.slane %v1393, 7
        %v1427 = vrot.slane %v1406, 6
        %v1428 = vrot.slane %v1419, 5
        %vm1429 = vcmask 1040384
        %v1430 = vsel %vm1429, %v1380, %v1426
        %vm1431 = vcmask 1042434
        %v1432 = vsel %vm1431, %v1427, %v1428
        %vm1433 = vcmask 1041408
        %v1434 = vsel %vm1433, %v1430, %v1432
        %v1436 = vlaneseq
        %vm1437 = vcmp.ge.s32.totalorder %v1436, 0
        %vm1438 = vcmp.lt.s32.totalorder %v1436, 512
        %vm1439 = vmand %vm1437, %vm1438
        %1440 = vst.msk [vmem:[%s274] sm:$0xf] %vm1439, %v1434
        %s1441 = sand.u32 %s183, 1
        %s1442 = scalar_lea.sflag [#allocation4], %s1441
        %s1443 = sand.u32 %s183, 1
        %s1444 = smul.addr %s1443, 4
        %s1445 = scalar_lea.vmem [#allocation3], %s1444
        // Predicated region
        $region49: #{tpu_custom_call.1} parent=47 // pred_check
          %p1446 = pneg %p193
        $region50: #{tpu_custom_call.1} parent=47 // pred_check_branch
          %1448 = sbr.rel (%p1446) target = $region52
        $region51: #{tpu_custom_call.1} parent=47 // pred_region
          %s1449 = smul.u32 4, %s23
          %1451 = vsyncadd %s1442, 0
          %s1452 = scalar_lea.hbm %s7, %s1449
          %s1454 = sshll.u32 %s1445, 4
          %s1455 = int_to_ptr.vmem [resolvable:$true] %s1454
          %s1456 = sshll.u32 %s1452, 4
          %s1457 = int_to_ptr.hbm [resolvable:$true] %s1456
          %1459 = dma.vmem_to_hbm [thread:$0]  %s1455, 64, %s1457, %s1442
        $region52: #{tpu_custom_call.1} parent=47 // pred_fallthru
          _
      $region48: #{tpu_custom_call.1} parent=5 // pred_fallthru
        _
      %p1460 = scmp.le.s32.totalorder 2, %s18
      // Predicated region
      $region53: #{tpu_custom_call.1} parent=5 // pred_check
        %p1461 = pneg %p1460
      $region54: #{tpu_custom_call.1} parent=5 // pred_check_branch
        %1463 = sbr.rel (%p1461) target = $region56
      $region55: #{tpu_custom_call.1} parent=5 // pred_region
        %s1464 = ssub.s32 %s18, 2
        // Predicated region
        $region57: #{tpu_custom_call.1} parent=55 // pred_check
          %p1465 = pneg %p199
        $region58: #{tpu_custom_call.1} parent=55 // pred_check_branch
          %1467 = sbr.rel (%p1465) target = $region60
        $region59: #{tpu_custom_call.1} parent=55 // pred_region
          %s1468 = sand.u32 %s184, 1
          %s1469 = scalar_lea.sflag [#allocation4], %s1468
          %s1470 = sand.u32 %s184, 1
          %s1471 = smul.addr %s1470, 4
          %s1472 = scalar_lea.vmem [#allocation3], %s1471
          %1474 = dma.done %s1469, 64
        $region60: #{tpu_custom_call.1} parent=55 // pred_fallthru
          _
      $region56: #{tpu_custom_call.1} parent=5 // pred_fallthru
        _
    $region6: #{tpu_custom_call.1} parent=1 // loop_footer
      %s22 = sadd.s32 1, %s18
    $region7: #{tpu_custom_call.1} parent=1 // loop_footer_branch
      %17 = sbr.rel target = $region3
    $region8: #{tpu_custom_call.1} parent=1 // loop_exit
      _
    %1475 = vsyncpa [#allocation4], 1
    %s1476 = scalar_lea.sflag [#allocation4], 1
    %1477 = vsyncpa %s1476, 1

</llo_original>
